<compile_context>
chip_gen: v7x
topology: tpu7x:2x2x1
jax: 0.10.0
libtpu: 0.0.40
codegen_flags: <defaults>
</compile_context>

<pallas_src>
import functools

import jax
import jax.numpy as jnp
from jax.experimental import pallas as pl
from jax.experimental.pallas import tpu as pltpu

LANE = 128       # lane width: last dim of every VMEM tile padded to this
SUBLANE = 16     # bf16 sublane pack: batch padded to a multiple of this
TM_MAX = 256     # batch tile once B grows (MXU M dim >= 256 on v6e/v7x)


def _round_up(n: int, m: int) -> int:
    return ((n + m - 1) // m) * m


# ----------------------------------------------------------------------------- kernel
def _mlp_kernel(*refs, activation, num_layers, use_mask):
    """Whole MLP forward for one batch tile.  Layer loop is Python-unrolled
    (num_layers is static and small); activations never leave VMEM/vregs."""
    it = iter(refs)
    x_ref = next(it)                      # (tm, in_pad)  bf16
    w1_ref = next(it)                     # (in_pad, h_pad) bf16
    b1_ref = next(it)                     # (1, h_pad)    f32
    wh_ref = bh_ref = None
    if num_layers > 1:
        wh_ref = next(it)                 # (L-1, h_pad, h_pad) bf16
        bh_ref = next(it)                 # (L-1, 1, h_pad)     f32
    wo_ref = next(it)                     # (h_pad, out_pad) bf16
    bo_ref = next(it)                     # (1, out_pad)     f32
    mask_ref = None
    if use_mask:
        mask_ref = next(it)               # (L, tm, h_pad) bf16 (0 or 1/(1-p))
    o_ref = next(it)                      # (tm, out_pad)  f32

    def act(y):
        if activation == "relu":
            return jnp.maximum(y, 0.0)
        if activation == "tanh":
            return jnp.tanh(y)
        return jax.nn.sigmoid(y)          # "sigmoid"

    def layer_tail(h_f32, li):
        h_f32 = act(h_f32)
        if use_mask:
            # inverted-dropout scale; bf16 mask promotes to f32 in the multiply
            h_f32 = h_f32 * mask_ref[li]
        return h_f32.astype(jnp.bfloat16)  # MXU operand for the next layer

    # Layer 0: (tm, in_pad) @ (in_pad, h_pad), f32 accumulate on the MXU.
    h = jnp.dot(x_ref[...], w1_ref[...],
                preferred_element_type=jnp.float32) + b1_ref[...]
    h = layer_tail(h, 0)

    # Hidden layers 1..num_layers-1: (tm, h_pad) @ (h_pad, h_pad).
    for li in range(1, num_layers):
        h = jnp.dot(h, wh_ref[li - 1],
                    preferred_element_type=jnp.float32) + bh_ref[li - 1]
        h = layer_tail(h, li)

    # Output layer (no activation, no dropout).
    y = jnp.dot(h, wo_ref[...], preferred_element_type=jnp.float32) + bo_ref[...]
    o_ref[...] = y.astype(o_ref.dtype)


# ----------------------------------------------------------------------------- wrapper
def _mlp_forward(x_pad, w1, b1, wh, bh, wo, bo, masks, *,
                 activation, num_layers, tm, real_dims):
    B_pad, in_pad = x_pad.shape
    h_pad = w1.shape[1]
    out_pad = wo.shape[1]
    use_mask = masks is not None
    grid = (B_pad // tm,)

    args = [x_pad, w1, b1]
    in_specs = [
        pl.BlockSpec((tm, in_pad), lambda i: (i, 0)),          # batch-tiled
        pl.BlockSpec((in_pad, h_pad), lambda i: (0, 0)),       # VMEM-resident
        pl.BlockSpec((1, h_pad), lambda i: (0, 0)),
    ]
    if num_layers > 1:
        args += [wh, bh]
        in_specs += [
            pl.BlockSpec((num_layers - 1, h_pad, h_pad), lambda i: (0, 0, 0)),
            pl.BlockSpec((num_layers - 1, 1, h_pad), lambda i: (0, 0, 0)),
        ]
    args += [wo, bo]
    in_specs += [
        pl.BlockSpec((h_pad, out_pad), lambda i: (0, 0)),
        pl.BlockSpec((1, out_pad), lambda i: (0, 0)),
    ]
    if use_mask:
        args.append(masks)
        in_specs.append(
            pl.BlockSpec((num_layers, tm, h_pad), lambda i: (0, i, 0)))

    # Advisory cost estimate on real (unpadded) dims.
    B, d_in, d_h, d_out = real_dims
    flops = 2 * B * (d_in * d_h + (num_layers - 1) * d_h * d_h + d_h * d_out)
    transcendentals = 0 if activation == "relu" else num_layers * B * d_h
    bytes_accessed = int(sum(int(a.size) * a.dtype.itemsize for a in args)
                         + B_pad * out_pad * 4)

    kernel = functools.partial(_mlp_kernel, activation=activation,
                               num_layers=num_layers, use_mask=use_mask)

    return pl.pallas_call(
        kernel,
        grid=grid,
        in_specs=in_specs,
        out_specs=pl.BlockSpec((tm, out_pad), lambda i: (i, 0)),
        out_shape=jax.ShapeDtypeStruct((B_pad, out_pad), jnp.float32),
        compiler_params=pltpu.CompilerParams(
            dimension_semantics=("parallel",)),      # 2-TC sharding on v7x
        cost_estimate=pl.CostEstimate(flops=flops,
                                      transcendentals=transcendentals,
                                      bytes_accessed=bytes_accessed),
    )(*args)
    # TODO(synk): for non-toy hidden/output dims, add feature tiling
    # (grid=(B//tm, out//tn, hid//tk), f32 VMEM accumulator, pl.when init/finalize)
    # with generation-aware tile sizes (v7x: 64 MiB physical / 32 MiB scoped VMEM,
    # N tiles in multiples of 256 for the 2x256x256 MXU on v6e/v7x) and an explicit
    # vmem_limit_bytes.
    # TODO(synk): on v7x, consider fp8 storage for the dominant layer-0 weight.


# ----------------------------------------------------------------------------- module
class MLP:
    """Pallas port of the torch MLP: x.view(B,-1) -> [Linear->act->Dropout]*L -> Linear.

    Weights are stored transposed (W_t[in, out], so y = x @ W_t + b, matching
    torch's x @ W.T + b), zero-padded to 128-lane-aligned shapes, kept in bf16.
    Biases stay f32.  Zero padding keeps the math exact in the unpadded region;
    __call__ slices the real (B, output_dim) result out.
    """

    def __init__(self, input_dim, hidden_dim, output_dim, num_layers,
                 activation_fn, dropout, *, key):
        if activation_fn not in ("relu", "tanh", "sigmoid"):
            raise ValueError(
                f"Activation function {activation_fn} not supported, "
                "must be one of: relu, tanh, sigmoid")
        self.activation_fn = activation_fn
        self.dropout = float(dropout)
        self.num_layers = int(num_layers)
        self.input_dim = int(input_dim)
        self.hidden_dim = int(hidden_dim)
        self.output_dim = int(output_dim)

        self.in_pad = _round_up(self.input_dim, LANE)
        self.h_pad = _round_up(self.hidden_dim, LANE)
        self.out_pad = _round_up(self.output_dim, LANE)

        def make_linear(k, fan_in, fan_out, pad_in, pad_out):
            kw, kb = jax.random.split(k)
            bound = 1.0 / (fan_in ** 0.5)             # torch.nn.Linear default init
            w_t = jax.random.uniform(kw, (fan_in, fan_out), jnp.float32, -bound, bound)
            b = jax.random.uniform(kb, (fan_out,), jnp.float32, -bound, bound)
            w_t = jnp.pad(w_t, ((0, pad_in - fan_in), (0, pad_out - fan_out)))
            b = jnp.pad(b, (0, pad_out - fan_out)).reshape(1, pad_out)
            return w_t.astype(jnp.bfloat16), b        # weights bf16, bias f32

        key, k0 = jax.random.split(key)
        self.w1, self.b1 = make_linear(k0, self.input_dim, self.hidden_dim,
                                       self.in_pad, self.h_pad)

        if self.num_layers > 1:
            wh_list, bh_list = [], []
            for _ in range(self.num_layers - 1):
                key, kl = jax.random.split(key)
                w, b = make_linear(kl, self.hidden_dim, self.hidden_dim,
                                   self.h_pad, self.h_pad)
                wh_list.append(w)
                bh_list.append(b)
            self.wh = jnp.stack(wh_list)              # (L-1, h_pad, h_pad) bf16
            self.bh = jnp.stack(bh_list)              # (L-1, 1, h_pad)     f32
        else:
            self.wh = None                            # never DMA'd (dead weight removed)
            self.bh = None

        key, ko = jax.random.split(key)
        self.wo, self.bo = make_linear(ko, self.hidden_dim, self.output_dim,
                                       self.h_pad, self.out_pad)

    def __call__(self, x, *, dropout_key=None, training=True):
        B = x.shape[0]
        x2d = x.reshape(B, -1).astype(jnp.float32)    # torch: x.view(B, -1)
        assert x2d.shape[1] == self.input_dim

        # Batch tiling: full-extent tile for small batches, 256-row tiles otherwise.
        if B >= TM_MAX:
            tm = TM_MAX
            B_pad = _round_up(B, tm)
        else:
            B_pad = _round_up(max(B, 1), SUBLANE)
            tm = B_pad

        x_pad = jnp.pad(x2d, ((0, B_pad - B), (0, self.in_pad - x2d.shape[1])))
        x_pad = x_pad.astype(jnp.bfloat16)            # halve input HBM->VMEM bytes

        use_dropout = training and self.dropout > 0.0
        if use_dropout:
            if dropout_key is None:
                # jit/trace-safe: no hidden RNG state mutation inside __call__.
                raise ValueError("dropout_key is required when training with dropout > 0")
            keep = jax.random.bernoulli(dropout_key, 1.0 - self.dropout,
                                        (self.num_layers, B_pad, self.h_pad))
            masks = (keep.astype(jnp.float32) / (1.0 - self.dropout)).astype(jnp.bfloat16)
        else:
            masks = None                              # no dead all-ones mask DMA

        y = _mlp_forward(x_pad, self.w1, self.b1, self.wh, self.bh,
                         self.wo, self.bo, masks,
                         activation=self.activation_fn,
                         num_layers=self.num_layers, tm=tm,
                         real_dims=(B, self.input_dim, self.hidden_dim,
                                    self.output_dim))
        return y[:B, :self.output_dim]


# ----------------------------------------------------------------------------- main
if __name__ == "__main__":
    key = jax.random.PRNGKey(0)
    k_in, k_params, k_drop = jax.random.split(key, 3)

    B, C, H, W = 2, 4, 16, 16          # input_dim = C*H*W = 1024
    hidden_dim = 32
    output_dim = 16
    num_layers = 2
    dropout_p = 0.1

    x = jax.random.normal(k_in, (B, C, H, W), jnp.float32)

    mlp = MLP(input_dim=C * H * W, hidden_dim=hidden_dim, output_dim=output_dim,
              num_layers=num_layers, activation_fn="relu", dropout=dropout_p,
              key=k_params)

    out = mlp(x, dropout_key=k_drop)                 # training path (dropout active)
    jax.block_until_ready(out)
    assert out.shape == (B, output_dim), out.shape
    assert bool(jnp.all(jnp.isfinite(out)))

    out_eval = mlp(x, training=False)                # eval path (no mask DMA)
    jax.block_until_ready(out_eval)
    assert out_eval.shape == (B, output_dim), out_eval.shape
    assert bool(jnp.all(jnp.isfinite(out_eval)))

    print("KERNEL_OK")
</pallas_src>

<mosaic_0001>
module attributes {stable_mosaic.version = 11 : i64} {
  func.func @_mlp_kernel(%arg0: i32, %arg1: memref<16x1024xbf16, #tpu.memory_space<vmem>>, %arg2: memref<1024x128xbf16, #tpu.memory_space<vmem>>, %arg3: memref<1x128xf32, #tpu.memory_space<vmem>>, %arg4: memref<1x128x128xbf16, #tpu.memory_space<vmem>>, %arg5: memref<1x1x128xf32, #tpu.memory_space<vmem>>, %arg6: memref<128x128xbf16, #tpu.memory_space<vmem>>, %arg7: memref<1x128xf32, #tpu.memory_space<vmem>>, %arg8: memref<2x16x128xbf16, #tpu.memory_space<vmem>>, %arg9: memref<16x128xf32, #tpu.memory_space<vmem>>) attributes {dimension_semantics = [#tpu.dimension_semantics<parallel>], iteration_bounds = array<i64: 1>, scalar_prefetch = 0 : i64, scratch_operands = 0 : i64, tpu.core_type = #tpu.core_type<tc>, window_params = [{transform_indices = @transform_0, window_bounds = array<i64: 16, 1024>}, {pipeline_mode = #tpu.pipeline_mode<synchronous>, transform_indices = @transform_1, window_bounds = array<i64: 1024, 128>}, {pipeline_mode = #tpu.pipeline_mode<synchronous>, transform_indices = @transform_2, window_bounds = array<i64: 1, 128>}, {pipeline_mode = #tpu.pipeline_mode<synchronous>, transform_indices = @transform_3, window_bounds = array<i64: 1, 128, 128>}, {pipeline_mode = #tpu.pipeline_mode<synchronous>, transform_indices = @transform_4, window_bounds = array<i64: 1, 1, 128>}, {pipeline_mode = #tpu.pipeline_mode<synchronous>, transform_indices = @transform_5, window_bounds = array<i64: 128, 128>}, {pipeline_mode = #tpu.pipeline_mode<synchronous>, transform_indices = @transform_6, window_bounds = array<i64: 1, 128>}, {transform_indices = @transform_7, window_bounds = array<i64: 2, 16, 128>}, {transform_indices = @transform_8, window_bounds = array<i64: 16, 128>}]} {
    %c0 = arith.constant 0 : index
    %c0_0 = arith.constant 0 : index
    %0 = vector.load %arg1[%c0, %c0_0] : memref<16x1024xbf16, #tpu.memory_space<vmem>>, vector<16x1024xbf16>
    %c0_1 = arith.constant 0 : index
    %c0_2 = arith.constant 0 : index
    %1 = vector.load %arg2[%c0_1, %c0_2] : memref<1024x128xbf16, #tpu.memory_space<vmem>>, vector<1024x128xbf16>
    %cst = arith.constant dense<0.000000e+00> : vector<16x128xf32>
    %2 = tpu.matmul %0, %1, %cst {dimension_numbers = #tpu.dot_dimension_numbers<[1], [0], [0], [1], [0, 0, 1, 1], [], []>} : vector<16x1024xbf16>, vector<1024x128xbf16>, vector<16x128xf32> -> vector<16x128xf32>
    %c0_3 = arith.constant 0 : index
    %c0_4 = arith.constant 0 : index
    %3 = vector.load %arg3[%c0_3, %c0_4] : memref<1x128xf32, #tpu.memory_space<vmem>>, vector<1x128xf32>
    %4 = vector.broadcast %3 : vector<1x128xf32> to vector<16x128xf32>
    %5 = arith.addf %2, %4 : vector<16x128xf32>
    %cst_5 = arith.constant 0.000000e+00 : f32
    %6 = vector.broadcast %cst_5 : f32 to vector<16x128xf32>
    %7 = arith.maximumf %5, %6 : vector<16x128xf32>
    %c0_6 = arith.constant 0 : index
    %c0_7 = arith.constant 0 : index
    %c0_8 = arith.constant 0 : index
    %8 = vector.load %arg8[%c0_6, %c0_7, %c0_8] : memref<2x16x128xbf16, #tpu.memory_space<vmem>>, vector<1x16x128xbf16>
    %9 = vector.shape_cast %8 : vector<1x16x128xbf16> to vector<16x128xbf16>
    %10 = arith.extf %9 : vector<16x128xbf16> to vector<16x128xf32>
    %11 = arith.mulf %7, %10 : vector<16x128xf32>
    %12 = arith.truncf %11 : vector<16x128xf32> to vector<16x128xbf16>
    %c0_9 = arith.constant 0 : index
    %c0_10 = arith.constant 0 : index
    %c0_11 = arith.constant 0 : index
    %13 = vector.load %arg4[%c0_9, %c0_10, %c0_11] : memref<1x128x128xbf16, #tpu.memory_space<vmem>>, vector<1x128x128xbf16>
    %14 = vector.shape_cast %13 : vector<1x128x128xbf16> to vector<128x128xbf16>
    %cst_12 = arith.constant dense<0.000000e+00> : vector<16x128xf32>
    %15 = tpu.matmul %12, %14, %cst_12 {dimension_numbers = #tpu.dot_dimension_numbers<[1], [0], [0], [1], [0, 0, 1, 1], [], []>} : vector<16x128xbf16>, vector<128x128xbf16>, vector<16x128xf32> -> vector<16x128xf32>
    %c0_13 = arith.constant 0 : index
    %c0_14 = arith.constant 0 : index
    %c0_15 = arith.constant 0 : index
    %16 = vector.load %arg5[%c0_13, %c0_14, %c0_15] : memref<1x1x128xf32, #tpu.memory_space<vmem>>, vector<1x1x128xf32>
    %17 = vector.shape_cast %16 : vector<1x1x128xf32> to vector<1x128xf32>
    %18 = vector.broadcast %17 : vector<1x128xf32> to vector<16x128xf32>
    %19 = arith.addf %15, %18 : vector<16x128xf32>
    %cst_16 = arith.constant 0.000000e+00 : f32
    %20 = vector.broadcast %cst_16 : f32 to vector<16x128xf32>
    %21 = arith.maximumf %19, %20 : vector<16x128xf32>
    %c1 = arith.constant 1 : index
    %c0_17 = arith.constant 0 : index
    %c0_18 = arith.constant 0 : index
    %22 = vector.load %arg8[%c1, %c0_17, %c0_18] : memref<2x16x128xbf16, #tpu.memory_space<vmem>>, vector<1x16x128xbf16>
    %23 = vector.shape_cast %22 : vector<1x16x128xbf16> to vector<16x128xbf16>
    %24 = arith.extf %23 : vector<16x128xbf16> to vector<16x128xf32>
    %25 = arith.mulf %21, %24 : vector<16x128xf32>
    %26 = arith.truncf %25 : vector<16x128xf32> to vector<16x128xbf16>
    %c0_19 = arith.constant 0 : index
    %c0_20 = arith.constant 0 : index
    %27 = vector.load %arg6[%c0_19, %c0_20] : memref<128x128xbf16, #tpu.memory_space<vmem>>, vector<128x128xbf16>
    %cst_21 = arith.constant dense<0.000000e+00> : vector<16x128xf32>
    %28 = tpu.matmul %26, %27, %cst_21 {dimension_numbers = #tpu.dot_dimension_numbers<[1], [0], [0], [1], [0, 0, 1, 1], [], []>} : vector<16x128xbf16>, vector<128x128xbf16>, vector<16x128xf32> -> vector<16x128xf32>
    %c0_22 = arith.constant 0 : index
    %c0_23 = arith.constant 0 : index
    %29 = vector.load %arg7[%c0_22, %c0_23] : memref<1x128xf32, #tpu.memory_space<vmem>>, vector<1x128xf32>
    %30 = vector.broadcast %29 : vector<1x128xf32> to vector<16x128xf32>
    %31 = arith.addf %28, %30 : vector<16x128xf32>
    %c0_24 = arith.constant 0 : index
    %c0_25 = arith.constant 0 : index
    %32 = vector.load %arg9[%c0_24, %c0_25] : memref<16x128xf32, #tpu.memory_space<vmem>>, vector<16x128xf32>
    tpu.vector_store %arg9[%c0_24, %c0_25], %31 {strides = array<i32>} : memref<16x128xf32, #tpu.memory_space<vmem>>, vector<16x128xf32>,
    return
  }
  func.func @transform_0(%arg0: i32) -> (i32, i32) {
    %c0_i32 = arith.constant 0 : i32
    %c0_i32_0 = arith.constant 0 : i32
    return %arg0, %c0_i32 : i32, i32
  }
  func.func @transform_1(%arg0: i32) -> (i32, i32) {
    %c0_i32 = arith.constant 0 : i32
    %c0_i32_0 = arith.constant 0 : i32
    %c0_i32_1 = arith.constant 0 : i32
    return %c0_i32, %c0_i32_0 : i32, i32
  }
  func.func @transform_2(%arg0: i32) -> (i32, i32) {
    %c0_i32 = arith.constant 0 : i32
    %c0_i32_0 = arith.constant 0 : i32
    %c0_i32_1 = arith.constant 0 : i32
    return %c0_i32, %c0_i32_0 : i32, i32
  }
  func.func @transform_3(%arg0: i32) -> (i32, i32, i32) {
    %c0_i32 = arith.constant 0 : i32
    %c0_i32_0 = arith.constant 0 : i32
    %c0_i32_1 = arith.constant 0 : i32
    %c0_i32_2 = arith.constant 0 : i32
    return %c0_i32, %c0_i32_0, %c0_i32_1 : i32, i32, i32
  }
  func.func @transform_4(%arg0: i32) -> (i32, i32, i32) {
    %c0_i32 = arith.constant 0 : i32
    %c0_i32_0 = arith.constant 0 : i32
    %c0_i32_1 = arith.constant 0 : i32
    %c0_i32_2 = arith.constant 0 : i32
    return %c0_i32, %c0_i32_0, %c0_i32_1 : i32, i32, i32
  }
  func.func @transform_5(%arg0: i32) -> (i32, i32) {
    %c0_i32 = arith.constant 0 : i32
    %c0_i32_0 = arith.constant 0 : i32
    %c0_i32_1 = arith.constant 0 : i32
    return %c0_i32, %c0_i32_0 : i32, i32
  }
  func.func @transform_6(%arg0: i32) -> (i32, i32) {
    %c0_i32 = arith.constant 0 : i32
    %c0_i32_0 = arith.constant 0 : i32
    %c0_i32_1 = arith.constant 0 : i32
    return %c0_i32, %c0_i32_0 : i32, i32
  }
  func.func @transform_7(%arg0: i32) -> (i32, i32, i32) {
    %c0_i32 = arith.constant 0 : i32
    %c0_i32_0 = arith.constant 0 : i32
    %c0_i32_1 = arith.constant 0 : i32
    return %c0_i32, %arg0, %c0_i32_0 : i32, i32, i32
  }
  func.func @transform_8(%arg0: i32) -> (i32, i32) {
    %c0_i32 = arith.constant 0 : i32
    %c0_i32_0 = arith.constant 0 : i32
    return %arg0, %c0_i32 : i32, i32
  }
}

</mosaic_0001>

<llo_original>
// kernel: tpu_custom_call.1
$region0: #{tpu_custom_call.1}
  #allocation0 [shape = 'u32[]', space=smem, size = 0x4, offset = 0x4, fixed_abs, tag = 'smem constant byte address 0x4 - core index']
  #allocation1 [shape = 'u32[144,128]{1,0:T(1,128)}', space=vmem, size = 0x12000, scoped, tag = 'internal scratch']
  %s0 = inlined_call_operand.hbm [shape: bf16[16,1024], index: 0, kind: input, shape index: {}]
  %s1 = inlined_call_operand.hbm [shape: bf16[1024,128], index: 1, kind: input, shape index: {}]
  %s2 = inlined_call_operand.vmem [shape: f32[1,128], index: 2, kind: input, shape index: {}]
  %s3 = inlined_call_operand.hbm [shape: bf16[1,128,128], index: 3, kind: input, shape index: {}]
  %s4 = inlined_call_operand.vmem [shape: f32[1,1,128], index: 4, kind: input, shape index: {}]
  %s5 = inlined_call_operand.hbm [shape: bf16[128,128], index: 5, kind: input, shape index: {}]
  %s6 = inlined_call_operand.vmem [shape: f32[1,128], index: 6, kind: input, shape index: {}]
  %s7 = inlined_call_operand.vmem [shape: bf16[2,16,128], index: 7, kind: input, shape index: {}]
  %s8 = inlined_call_operand.hbm [shape: f32[16,128], index: 8, kind: output, shape index: {}]
  %s9 = sld [smem:[#allocation0]]
  $region58: #{tpu_custom_call.1} parent=0
    _
  %s11 = ssub.s32 1, %s9
  %s12 = scalar_select 0, %s11, %s9
  $region1: #{tpu_custom_call.1} parent=0
    #allocation2 [shape = 'u8[32768]{0}', space=vmem, size = 0x8000, scoped, tag = 'input window, operand 0, single buffered']
    #allocation3 [shape = 's32[1]{0}', space=sflag, size = 0x4, scoped, tag = 'scoped memory for tpu_custom_call.1']
    #allocation4 [shape = 's32[1]{0}', space=sflag, size = 0x4, scoped, tag = 'scoped memory for tpu_custom_call.1']
    #allocation5 [shape = 'u8[262144]{0}', space=vmem, size = 0x40000, scoped, tag = 'input window, operand 1, single buffered']
    #allocation6 [shape = 's32[1]{0}', space=sflag, size = 0x4, scoped, tag = 'scoped memory for tpu_custom_call.1']
    #allocation7 [shape = 'u8[32768]{0}', space=vmem, size = 0x8000, scoped, tag = 'input window, operand 3, single buffered']
    #allocation8 [shape = 'u8[32768]{0}', space=vmem, size = 0x8000, scoped, tag = 'input window, operand 5, single buffered']
    #allocation9 [shape = 's32[1]{0}', space=sflag, size = 0x4, scoped, tag = 'scoped memory for tpu_custom_call.1']
    #allocation10 [shape = 'u8[8192]{0}', space=vmem, size = 0x2000, scoped, tag = 'output window, operand 0, single buffered']
    %13 = vsyncpa [#allocation3], 0
    %14 = vsyncpa [#allocation6], 0
    %15 = vsyncpa [#allocation9], 0
    %16 = vsyncpa [#allocation4], 0
    // Predicated region
    $region2: #{tpu_custom_call.1} parent=1 // pred_check
      _
    $region3: #{tpu_custom_call.1} parent=1 // pred_check_branch
      %18 = sbr.rel (0) target = $region5
    $region4: #{tpu_custom_call.1} parent=1 // pred_region
      %s20 = ssub.s32 1024, 1024
      %21 = vsyncadd [#allocation3], %s20
      %s22 = sshll.u32 [#allocation2], 4
      %s23 = int_to_ptr.vmem [resolvable:$true] %s22
      %28 = dma.hbm_to_vmem [thread:$0]  %s0, 1024, %s23, [#allocation3], 512, 512, 32
    $region5: #{tpu_custom_call.1} parent=1 // pred_fallthru
      _
    // Predicated region
    $region6: #{tpu_custom_call.1} parent=1 // pred_check
      _
    $region7: #{tpu_custom_call.1} parent=1 // pred_check_branch
      %30 = sbr.rel (0) target = $region9
    $region8: #{tpu_custom_call.1} parent=1 // pred_region
      %s32 = ssub.s32 8192, 8192
      %33 = vsyncadd [#allocation6], %s32
      %s34 = sshll.u32 [#allocation5], 4
      %s35 = int_to_ptr.vmem [resolvable:$true] %s34
      %40 = dma.hbm_to_vmem [thread:$0]  %s1, 8192, %s35, [#allocation6], 64, 64, 4
    $region9: #{tpu_custom_call.1} parent=1 // pred_fallthru
      _
    // Predicated region
    $region10: #{tpu_custom_call.1} parent=1 // pred_check
      _
    $region11: #{tpu_custom_call.1} parent=1 // pred_check_branch
      %42 = sbr.rel (0) target = $region13
    $region12: #{tpu_custom_call.1} parent=1 // pred_region
      _
    $region13: #{tpu_custom_call.1} parent=1 // pred_fallthru
      _
    // Predicated region
    $region14: #{tpu_custom_call.1} parent=1 // pred_check
      _
    $region15: #{tpu_custom_call.1} parent=1 // pred_check_branch
      %44 = sbr.rel (0) target = $region17
    $region16: #{tpu_custom_call.1} parent=1 // pred_region
      %s46 = ssub.s32 1024, 1024
      %47 = vsyncadd [#allocation6], %s46
      %s48 = sshll.u32 [#allocation7], 4
      %s49 = int_to_ptr.vmem [resolvable:$true] %s48
      %54 = dma.hbm_to_vmem [thread:$0]  %s3, 1024, %s49, [#allocation6], 64, 64, 4
    $region17: #{tpu_custom_call.1} parent=1 // pred_fallthru
      _
    // Predicated region
    $region18: #{tpu_custom_call.1} parent=1 // pred_check
      _
    $region19: #{tpu_custom_call.1} parent=1 // pred_check_branch
      %56 = sbr.rel (0) target = $region21
    $region20: #{tpu_custom_call.1} parent=1 // pred_region
      _
    $region21: #{tpu_custom_call.1} parent=1 // pred_fallthru
      _
    // Predicated region
    $region22: #{tpu_custom_call.1} parent=1 // pred_check
      _
    $region23: #{tpu_custom_call.1} parent=1 // pred_check_branch
      %58 = sbr.rel (0) target = $region25
    $region24: #{tpu_custom_call.1} parent=1 // pred_region
      %s60 = ssub.s32 1024, 1024
      %61 = vsyncadd [#allocation9], %s60
      %s62 = sshll.u32 [#allocation8], 4
      %s63 = int_to_ptr.vmem [resolvable:$true] %s62
      %68 = dma.hbm_to_vmem [thread:$0]  %s5, 1024, %s63, [#allocation9], 64, 64, 4
    $region25: #{tpu_custom_call.1} parent=1 // pred_fallthru
      _
    // Predicated region
    $region26: #{tpu_custom_call.1} parent=1 // pred_check
      _
    $region27: #{tpu_custom_call.1} parent=1 // pred_check_branch
      %70 = sbr.rel (0) target = $region29
    $region28: #{tpu_custom_call.1} parent=1 // pred_region
      _
    $region29: #{tpu_custom_call.1} parent=1 // pred_fallthru
      _
    // Predicated region
    $region30: #{tpu_custom_call.1} parent=1 // pred_check
      _
    $region31: #{tpu_custom_call.1} parent=1 // pred_check_branch
      %72 = sbr.rel (0) target = $region33
    $region32: #{tpu_custom_call.1} parent=1 // pred_region
      _
    $region33: #{tpu_custom_call.1} parent=1 // pred_fallthru
      _
    // Predicated region
    $region34: #{tpu_custom_call.1} parent=1 // pred_check
      _
    $region35: #{tpu_custom_call.1} parent=1 // pred_check_branch
      %74 = sbr.rel (0) target = $region37
    $region36: #{tpu_custom_call.1} parent=1 // pred_region
      %75 = dma.done [#allocation3], 1024
    $region37: #{tpu_custom_call.1} parent=1 // pred_fallthru
      _
    // Predicated region
    $region38: #{tpu_custom_call.1} parent=1 // pred_check
      _
    $region39: #{tpu_custom_call.1} parent=1 // pred_check_branch
      %77 = sbr.rel (0) target = $region41
    $region40: #{tpu_custom_call.1} parent=1 // pred_region
      %78 = dma.done [#allocation6], 8192
    $region41: #{tpu_custom_call.1} parent=1 // pred_fallthru
      _
    // Predicated region
    $region42: #{tpu_custom_call.1} parent=1 // pred_check
      _
    $region43: #{tpu_custom_call.1} parent=1 // pred_check_branch
      %80 = sbr.rel (0) target = $region45
    $region44: #{tpu_custom_call.1} parent=1 // pred_region
      %81 = dma.done [#allocation6], 1024
    $region45: #{tpu_custom_call.1} parent=1 // pred_fallthru
      _
    // Predicated region
    $region46: #{tpu_custom_call.1} parent=1 // pred_check
      _
    $region47: #{tpu_custom_call.1} parent=1 // pred_check_branch
      %83 = sbr.rel (0) target = $region49
    $region48: #{tpu_custom_call.1} parent=1 // pred_region
      %84 = dma.done [#allocation9], 1024
    $region49: #{tpu_custom_call.1} parent=1 // pred_fallthru
      _
    %v86 = vld [vmem:[#allocation2] sm:$0xff]
    %v87 = vld [vmem:[#allocation2 + $0x8] sm:$0xff]
    %v88 = vld [vmem:[#allocation2 + $0x10] sm:$0xff]
    %v89 = vld [vmem:[#allocation2 + $0x18] sm:$0xff]
    %v90 = vld [vmem:[#allocation2 + $0x20] sm:$0xff]
    %v91 = vld [vmem:[#allocation2 + $0x28] sm:$0xff]
    %v92 = vld [vmem:[#allocation2 + $0x30] sm:$0xff]
    %v93 = vld [vmem:[#allocation2 + $0x38] sm:$0xff]
    %v94 = vld [vmem:[#allocation5] sm:$0xf]
    %v95 = vld [vmem:[#allocation5 + $0x4] sm:$0xf]
    %v96 = vld [vmem:[#allocation5 + $0x8] sm:$0xf]
    %v97 = vld [vmem:[#allocation5 + $0xc] sm:$0xf]
    %v98 = vld [vmem:[#allocation5 + $0x10] sm:$0xf]
    %v99 = vld [vmem:[#allocation5 + $0x14] sm:$0xf]
    %v100 = vld [vmem:[#allocation5 + $0x18] sm:$0xf]
    %v101 = vld [vmem:[#allocation5 + $0x1c] sm:$0xf]
    %v102 = vld [vmem:[#allocation5 + $0x20] sm:$0xf]
    %v103 = vld [vmem:[#allocation5 + $0x24] sm:$0xf]
    %v104 = vld [vmem:[#allocation5 + $0x28] sm:$0xf]
    %v105 = vld [vmem:[#allocation5 + $0x2c] sm:$0xf]
    %v106 = vld [vmem:[#allocation5 + $0x30] sm:$0xf]
    %v107 = vld [vmem:[#allocation5 + $0x34] sm:$0xf]
    %v108 = vld [vmem:[#allocation5 + $0x38] sm:$0xf]
    %v109 = vld [vmem:[#allocation5 + $0x3c] sm:$0xf]
    %v110 = vld [vmem:[#allocation5 + $0x40] sm:$0xf]
    %v111 = vld [vmem:[#allocation5 + $0x44] sm:$0xf]
    %v112 = vld [vmem:[#allocation5 + $0x48] sm:$0xf]
    %v113 = vld [vmem:[#allocation5 + $0x4c] sm:$0xf]
    %v114 = vld [vmem:[#allocation5 + $0x50] sm:$0xf]
    %v115 = vld [vmem:[#allocation5 + $0x54] sm:$0xf]
    %v116 = vld [vmem:[#allocation5 + $0x58] sm:$0xf]
    %v117 = vld [vmem:[#allocation5 + $0x5c] sm:$0xf]
    %v118 = vld [vmem:[#allocation5 + $0x60] sm:$0xf]
    %v119 = vld [vmem:[#allocation5 + $0x64] sm:$0xf]
    %v120 = vld [vmem:[#allocation5 + $0x68] sm:$0xf]
    %v121 = vld [vmem:[#allocation5 + $0x6c] sm:$0xf]
    %v122 = vld [vmem:[#allocation5 + $0x70] sm:$0xf]
    %v123 = vld [vmem:[#allocation5 + $0x74] sm:$0xf]
    %v124 = vld [vmem:[#allocation5 + $0x78] sm:$0xf]
    %v125 = vld [vmem:[#allocation5 + $0x7c] sm:$0xf]
    %v126 = vld [vmem:[#allocation5 + $0x80] sm:$0xf]
    %v127 = vld [vmem:[#allocation5 + $0x84] sm:$0xf]
    %v128 = vld [vmem:[#allocation5 + $0x88] sm:$0xf]
    %v129 = vld [vmem:[#allocation5 + $0x8c] sm:$0xf]
    %v130 = vld [vmem:[#allocation5 + $0x90] sm:$0xf]
    %v131 = vld [vmem:[#allocation5 + $0x94] sm:$0xf]
    %v132 = vld [vmem:[#allocation5 + $0x98] sm:$0xf]
    %v133 = vld [vmem:[#allocation5 + $0x9c] sm:$0xf]
    %v134 = vld [vmem:[#allocation5 + $0xa0] sm:$0xf]
    %v135 = vld [vmem:[#allocation5 + $0xa4] sm:$0xf]
    %v136 = vld [vmem:[#allocation5 + $0xa8] sm:$0xf]
    %v137 = vld [vmem:[#allocation5 + $0xac] sm:$0xf]
    %v138 = vld [vmem:[#allocation5 + $0xb0] sm:$0xf]
    %v139 = vld [vmem:[#allocation5 + $0xb4] sm:$0xf]
    %v140 = vld [vmem:[#allocation5 + $0xb8] sm:$0xf]
    %v141 = vld [vmem:[#allocation5 + $0xbc] sm:$0xf]
    %v142 = vld [vmem:[#allocation5 + $0xc0] sm:$0xf]
    %v143 = vld [vmem:[#allocation5 + $0xc4] sm:$0xf]
    %v144 = vld [vmem:[#allocation5 + $0xc8] sm:$0xf]
    %v145 = vld [vmem:[#allocation5 + $0xcc] sm:$0xf]
    %v146 = vld [vmem:[#allocation5 + $0xd0] sm:$0xf]
    %v147 = vld [vmem:[#allocation5 + $0xd4] sm:$0xf]
    %v148 = vld [vmem:[#allocation5 + $0xd8] sm:$0xf]
    %v149 = vld [vmem:[#allocation5 + $0xdc] sm:$0xf]
    %v150 = vld [vmem:[#allocation5 + $0xe0] sm:$0xf]
    %v151 = vld [vmem:[#allocation5 + $0xe4] sm:$0xf]
    %v152 = vld [vmem:[#allocation5 + $0xe8] sm:$0xf]
    %v153 = vld [vmem:[#allocation5 + $0xec] sm:$0xf]
    %v154 = vld [vmem:[#allocation5 + $0xf0] sm:$0xf]
    %v155 = vld [vmem:[#allocation5 + $0xf4] sm:$0xf]
    %v156 = vld [vmem:[#allocation5 + $0xf8] sm:$0xf]
    %v157 = vld [vmem:[#allocation5 + $0xfc] sm:$0xf]
    %v158 = vld [vmem:[#allocation5 + $0x100] sm:$0xf]
    %v159 = vld [vmem:[#allocation5 + $0x104] sm:$0xf]
    %v160 = vld [vmem:[#allocation5 + $0x108] sm:$0xf]
    %v161 = vld [vmem:[#allocation5 + $0x10c] sm:$0xf]
    %v162 = vld [vmem:[#allocation5 + $0x110] sm:$0xf]
    %v163 = vld [vmem:[#allocation5 + $0x114] sm:$0xf]
    %v164 = vld [vmem:[#allocation5 + $0x118] sm:$0xf]
    %v165 = vld [vmem:[#allocation5 + $0x11c] sm:$0xf]
    %v166 = vld [vmem:[#allocation5 + $0x120] sm:$0xf]
    %v167 = vld [vmem:[#allocation5 + $0x124] sm:$0xf]
    %v168 = vld [vmem:[#allocation5 + $0x128] sm:$0xf]
    %v169 = vld [vmem:[#allocation5 + $0x12c] sm:$0xf]
    %v170 = vld [vmem:[#allocation5 + $0x130] sm:$0xf]
    %v171 = vld [vmem:[#allocation5 + $0x134] sm:$0xf]
    %v172 = vld [vmem:[#allocation5 + $0x138] sm:$0xf]
    %v173 = vld [vmem:[#allocation5 + $0x13c] sm:$0xf]
    %v174 = vld [vmem:[#allocation5 + $0x140] sm:$0xf]
    %v175 = vld [vmem:[#allocation5 + $0x144] sm:$0xf]
    %v176 = vld [vmem:[#allocation5 + $0x148] sm:$0xf]
    %v177 = vld [vmem:[#allocation5 + $0x14c] sm:$0xf]
    %v178 = vld [vmem:[#allocation5 + $0x150] sm:$0xf]
    %v179 = vld [vmem:[#allocation5 + $0x154] sm:$0xf]
    %v180 = vld [vmem:[#allocation5 + $0x158] sm:$0xf]
    %v181 = vld [vmem:[#allocation5 + $0x15c] sm:$0xf]
    %v182 = vld [vmem:[#allocation5 + $0x160] sm:$0xf]
    %v183 = vld [vmem:[#allocation5 + $0x164] sm:$0xf]
    %v184 = vld [vmem:[#allocation5 + $0x168] sm:$0xf]
    %v185 = vld [vmem:[#allocation5 + $0x16c] sm:$0xf]
    %v186 = vld [vmem:[#allocation5 + $0x170] sm:$0xf]
    %v187 = vld [vmem:[#allocation5 + $0x174] sm:$0xf]
    %v188 = vld [vmem:[#allocation5 + $0x178] sm:$0xf]
    %v189 = vld [vmem:[#allocation5 + $0x17c] sm:$0xf]
    %v190 = vld [vmem:[#allocation5 + $0x180] sm:$0xf]
    %v191 = vld [vmem:[#allocation5 + $0x184] sm:$0xf]
    %v192 = vld [vmem:[#allocation5 + $0x188] sm:$0xf]
    %v193 = vld [vmem:[#allocation5 + $0x18c] sm:$0xf]
    %v194 = vld [vmem:[#allocation5 + $0x190] sm:$0xf]
    %v195 = vld [vmem:[#allocation5 + $0x194] sm:$0xf]
    %v196 = vld [vmem:[#allocation5 + $0x198] sm:$0xf]
    %v197 = vld [vmem:[#allocation5 + $0x19c] sm:$0xf]
    %v198 = vld [vmem:[#allocation5 + $0x1a0] sm:$0xf]
    %v199 = vld [vmem:[#allocation5 + $0x1a4] sm:$0xf]
    %v200 = vld [vmem:[#allocation5 + $0x1a8] sm:$0xf]
    %v201 = vld [vmem:[#allocation5 + $0x1ac] sm:$0xf]
    %v202 = vld [vmem:[#allocation5 + $0x1b0] sm:$0xf]
    %v203 = vld [vmem:[#allocation5 + $0x1b4] sm:$0xf]
    %v204 = vld [vmem:[#allocation5 + $0x1b8] sm:$0xf]
    %v205 = vld [vmem:[#allocation5 + $0x1bc] sm:$0xf]
    %v206 = vld [vmem:[#allocation5 + $0x1c0] sm:$0xf]
    %v207 = vld [vmem:[#allocation5 + $0x1c4] sm:$0xf]
    %v208 = vld [vmem:[#allocation5 + $0x1c8] sm:$0xf]
    %v209 = vld [vmem:[#allocation5 + $0x1cc] sm:$0xf]
    %v210 = vld [vmem:[#allocation5 + $0x1d0] sm:$0xf]
    %v211 = vld [vmem:[#allocation5 + $0x1d4] sm:$0xf]
    %v212 = vld [vmem:[#allocation5 + $0x1d8] sm:$0xf]
    %v213 = vld [vmem:[#allocation5 + $0x1dc] sm:$0xf]
    %v214 = vld [vmem:[#allocation5 + $0x1e0] sm:$0xf]
    %v215 = vld [vmem:[#allocation5 + $0x1e4] sm:$0xf]
    %v216 = vld [vmem:[#allocation5 + $0x1e8] sm:$0xf]
    %v217 = vld [vmem:[#allocation5 + $0x1ec] sm:$0xf]
    %v218 = vld [vmem:[#allocation5 + $0x1f0] sm:$0xf]
    %v219 = vld [vmem:[#allocation5 + $0x1f4] sm:$0xf]
    %v220 = vld [vmem:[#allocation5 + $0x1f8] sm:$0xf]
    %v221 = vld [vmem:[#allocation5 + $0x1fc] sm:$0xf]
    %v222 = vld [vmem:[%s2] sm:$0x1]
    %v224 = vlaneseq
    %v225 = vshrl.u32 %v224, 7
    %v226 = vsub.s32 0, %v225
    %v227 = vrot.slane %v222, %v226
    %v237 = vunpack.c.l.b16 %v86
    %v238 = vunpack.c.h.b16 %v86
    %v239 = vunpack.c.l.b16 %v87
    %v240 = vunpack.c.h.b16 %v87
    %v241 = vunpack.c.l.b16 %v88
    %v242 = vunpack.c.h.b16 %v88
    %v243 = vunpack.c.l.b16 %v89
    %v244 = vunpack.c.h.b16 %v89
    %v245 = vunpack.c.l.b16 %v90
    %v246 = vunpack.c.h.b16 %v90
    %v247 = vunpack.c.l.b16 %v91
    %v248 = vunpack.c.h.b16 %v91
    %v249 = vunpack.c.l.b16 %v92
    %v250 = vunpack.c.h.b16 %v92
    %v251 = vunpack.c.l.b16 %v93
    %v252 = vunpack.c.h.b16 %v93
    %v253 = vpack.c.b16 %v245, %v237
    %v254 = vpack.c.b16 %v246, %v238
    %v255 = vpack.c.b16 %v247, %v239
    %v256 = vpack.c.b16 %v248, %v240
    %v257 = vpack.c.b16 %v249, %v241
    %v258 = vpack.c.b16 %v250, %v242
    %v259 = vpack.c.b16 %v251, %v243
    %v260 = vpack.c.b16 %v252, %v244
    %v397 = vunpack.c.l.b16 %v94
    %v398 = vunpack.c.l.b16 %v95
    %v399 = vunpack.c.l.b16 %v96
    %v400 = vunpack.c.l.b16 %v97
    %v401 = vunpack.c.l.b16 %v98
    %v402 = vunpack.c.l.b16 %v99
    %v403 = vunpack.c.l.b16 %v100
    %v404 = vunpack.c.l.b16 %v101
    %v405 = vunpack.c.l.b16 %v102
    %v406 = vunpack.c.l.b16 %v103
    %v407 = vunpack.c.l.b16 %v104
    %v408 = vunpack.c.l.b16 %v105
    %v409 = vunpack.c.l.b16 %v106
    %v410 = vunpack.c.l.b16 %v107
    %v411 = vunpack.c.l.b16 %v108
    %v412 = vunpack.c.l.b16 %v109
    %v413 = vunpack.c.l.b16 %v110
    %v414 = vunpack.c.l.b16 %v111
    %v415 = vunpack.c.l.b16 %v112
    %v416 = vunpack.c.l.b16 %v113
    %v417 = vunpack.c.l.b16 %v114
    %v418 = vunpack.c.l.b16 %v115
    %v419 = vunpack.c.l.b16 %v116
    %v420 = vunpack.c.l.b16 %v117
    %v421 = vunpack.c.l.b16 %v118
    %v422 = vunpack.c.l.b16 %v119
    %v423 = vunpack.c.l.b16 %v120
    %v424 = vunpack.c.l.b16 %v121
    %v425 = vunpack.c.l.b16 %v122
    %v426 = vunpack.c.l.b16 %v123
    %v427 = vunpack.c.l.b16 %v124
    %v428 = vunpack.c.l.b16 %v125
    %v429 = vunpack.c.l.b16 %v126
    %v430 = vunpack.c.l.b16 %v127
    %v431 = vunpack.c.l.b16 %v128
    %v432 = vunpack.c.l.b16 %v129
    %v433 = vunpack.c.l.b16 %v130
    %v434 = vunpack.c.l.b16 %v131
    %v435 = vunpack.c.l.b16 %v132
    %v436 = vunpack.c.l.b16 %v133
    %v437 = vunpack.c.l.b16 %v134
    %v438 = vunpack.c.l.b16 %v135
    %v439 = vunpack.c.l.b16 %v136
    %v440 = vunpack.c.l.b16 %v137
    %v441 = vunpack.c.l.b16 %v138
    %v442 = vunpack.c.l.b16 %v139
    %v443 = vunpack.c.l.b16 %v140
    %v444 = vunpack.c.l.b16 %v141
    %v445 = vunpack.c.l.b16 %v142
    %v446 = vunpack.c.l.b16 %v143
    %v447 = vunpack.c.l.b16 %v144
    %v448 = vunpack.c.l.b16 %v145
    %v449 = vunpack.c.l.b16 %v146
    %v450 = vunpack.c.l.b16 %v147
    %v451 = vunpack.c.l.b16 %v148
    %v452 = vunpack.c.l.b16 %v149
    %v453 = vunpack.c.l.b16 %v150
    %v454 = vunpack.c.l.b16 %v151
    %v455 = vunpack.c.l.b16 %v152
    %v456 = vunpack.c.l.b16 %v153
    %v457 = vunpack.c.l.b16 %v154
    %v458 = vunpack.c.l.b16 %v155
    %v459 = vunpack.c.l.b16 %v156
    %v460 = vunpack.c.l.b16 %v157
    %v461 = vunpack.c.l.b16 %v158
    %v462 = vunpack.c.l.b16 %v159
    %v463 = vunpack.c.l.b16 %v160
    %v464 = vunpack.c.l.b16 %v161
    %v465 = vunpack.c.l.b16 %v162
    %v466 = vunpack.c.l.b16 %v163
    %v467 = vunpack.c.l.b16 %v164
    %v468 = vunpack.c.l.b16 %v165
    %v469 = vunpack.c.l.b16 %v166
    %v470 = vunpack.c.l.b16 %v167
    %v471 = vunpack.c.l.b16 %v168
    %v472 = vunpack.c.l.b16 %v169
    %v473 = vunpack.c.l.b16 %v170
    %v474 = vunpack.c.l.b16 %v171
    %v475 = vunpack.c.l.b16 %v172
    %v476 = vunpack.c.l.b16 %v173
    %v477 = vunpack.c.l.b16 %v174
    %v478 = vunpack.c.l.b16 %v175
    %v479 = vunpack.c.l.b16 %v176
    %v480 = vunpack.c.l.b16 %v177
    %v481 = vunpack.c.l.b16 %v178
    %v482 = vunpack.c.l.b16 %v179
    %v483 = vunpack.c.l.b16 %v180
    %v484 = vunpack.c.l.b16 %v181
    %v485 = vunpack.c.l.b16 %v182
    %v486 = vunpack.c.l.b16 %v183
    %v487 = vunpack.c.l.b16 %v184
    %v488 = vunpack.c.l.b16 %v185
    %v489 = vunpack.c.l.b16 %v186
    %v490 = vunpack.c.l.b16 %v187
    %v491 = vunpack.c.l.b16 %v188
    %v492 = vunpack.c.l.b16 %v189
    %v493 = vunpack.c.l.b16 %v190
    %v494 = vunpack.c.l.b16 %v191
    %v495 = vunpack.c.l.b16 %v192
    %v496 = vunpack.c.l.b16 %v193
    %v497 = vunpack.c.l.b16 %v194
    %v498 = vunpack.c.l.b16 %v195
    %v499 = vunpack.c.l.b16 %v196
    %v500 = vunpack.c.l.b16 %v197
    %v501 = vunpack.c.l.b16 %v198
    %v502 = vunpack.c.l.b16 %v199
    %v503 = vunpack.c.l.b16 %v200
    %v504 = vunpack.c.l.b16 %v201
    %v505 = vunpack.c.l.b16 %v202
    %v506 = vunpack.c.l.b16 %v203
    %v507 = vunpack.c.l.b16 %v204
    %v508 = vunpack.c.l.b16 %v205
    %v509 = vunpack.c.l.b16 %v206
    %v510 = vunpack.c.l.b16 %v207
    %v511 = vunpack.c.l.b16 %v208
    %v512 = vunpack.c.l.b16 %v209
    %v513 = vunpack.c.l.b16 %v210
    %v514 = vunpack.c.l.b16 %v211
    %v515 = vunpack.c.l.b16 %v212
    %v516 = vunpack.c.l.b16 %v213
    %v517 = vunpack.c.l.b16 %v214
    %v518 = vunpack.c.l.b16 %v215
    %v519 = vunpack.c.l.b16 %v216
    %v520 = vunpack.c.l.b16 %v217
    %v521 = vunpack.c.l.b16 %v218
    %v522 = vunpack.c.l.b16 %v219
    %v523 = vunpack.c.l.b16 %v220
    %v524 = vunpack.c.l.b16 %v221
    %v525 = vpack.c.b16 %v398, %v397
    %v526 = vpack.c.b16 %v400, %v399
    %v527 = vpack.c.b16 %v402, %v401
    %v528 = vpack.c.b16 %v404, %v403
    %v529 = vpack.c.b16 %v406, %v405
    %v530 = vpack.c.b16 %v408, %v407
    %v531 = vpack.c.b16 %v410, %v409
    %v532 = vpack.c.b16 %v412, %v411
    %v533 = vpack.c.b16 %v414, %v413
    %v534 = vpack.c.b16 %v416, %v415
    %v535 = vpack.c.b16 %v418, %v417
    %v536 = vpack.c.b16 %v420, %v419
    %v537 = vpack.c.b16 %v422, %v421
    %v538 = vpack.c.b16 %v424, %v423
    %v539 = vpack.c.b16 %v426, %v425
    %v540 = vpack.c.b16 %v428, %v427
    %v541 = vpack.c.b16 %v430, %v429
    %v542 = vpack.c.b16 %v432, %v431
    %v543 = vpack.c.b16 %v434, %v433
    %v544 = vpack.c.b16 %v436, %v435
    %v545 = vpack.c.b16 %v438, %v437
    %v546 = vpack.c.b16 %v440, %v439
    %v547 = vpack.c.b16 %v442, %v441
    %v548 = vpack.c.b16 %v444, %v443
    %v549 = vpack.c.b16 %v446, %v445
    %v550 = vpack.c.b16 %v448, %v447
    %v551 = vpack.c.b16 %v450, %v449
    %v552 = vpack.c.b16 %v452, %v451
    %v553 = vpack.c.b16 %v454, %v453
    %v554 = vpack.c.b16 %v456, %v455
    %v555 = vpack.c.b16 %v458, %v457
    %v556 = vpack.c.b16 %v460, %v459
    %v557 = vpack.c.b16 %v462, %v461
    %v558 = vpack.c.b16 %v464, %v463
    %v559 = vpack.c.b16 %v466, %v465
    %v560 = vpack.c.b16 %v468, %v467
    %v561 = vpack.c.b16 %v470, %v469
    %v562 = vpack.c.b16 %v472, %v471
    %v563 = vpack.c.b16 %v474, %v473
    %v564 = vpack.c.b16 %v476, %v475
    %v565 = vpack.c.b16 %v478, %v477
    %v566 = vpack.c.b16 %v480, %v479
    %v567 = vpack.c.b16 %v482, %v481
    %v568 = vpack.c.b16 %v484, %v483
    %v569 = vpack.c.b16 %v486, %v485
    %v570 = vpack.c.b16 %v488, %v487
    %v571 = vpack.c.b16 %v490, %v489
    %v572 = vpack.c.b16 %v492, %v491
    %v573 = vpack.c.b16 %v494, %v493
    %v574 = vpack.c.b16 %v496, %v495
    %v575 = vpack.c.b16 %v498, %v497
    %v576 = vpack.c.b16 %v500, %v499
    %v577 = vpack.c.b16 %v502, %v501
    %v578 = vpack.c.b16 %v504, %v503
    %v579 = vpack.c.b16 %v506, %v505
    %v580 = vpack.c.b16 %v508, %v507
    %v581 = vpack.c.b16 %v510, %v509
    %v582 = vpack.c.b16 %v512, %v511
    %v583 = vpack.c.b16 %v514, %v513
    %v584 = vpack.c.b16 %v516, %v515
    %v585 = vpack.c.b16 %v518, %v517
    %v586 = vpack.c.b16 %v520, %v519
    %v587 = vpack.c.b16 %v522, %v521
    %v588 = vpack.c.b16 %v524, %v523
    %653 = vmatprep.subr.bf16.mxu0 0
    %654 = vmatpush1.bf16.msra.mxu0 %v525
    %655 = vmatprep.subr.bf16.mxu0 0
    %656 = vmatpush1.bf16.msra.mxu0 %v526
    %657 = vmatprep.subr.bf16.mxu0 0
    %658 = vmatpush1.bf16.msra.mxu0 %v527
    %659 = vmatprep.subr.bf16.mxu0 0
    %660 = vmatpush1.bf16.msra.mxu0 %v528
    %661 = vmatprep.subr.bf16.mxu0 0
    %662 = vmatpush1.bf16.msra.mxu0 %v529
    %663 = vmatprep.subr.bf16.mxu0 0
    %664 = vmatpush1.bf16.msra.mxu0 %v530
    %665 = vmatprep.subr.bf16.mxu0 0
    %666 = vmatpush1.bf16.msra.mxu0 %v531
    %667 = vmatprep.subr.bf16.mxu0 0
    %668 = vmatpush1.bf16.msra.mxu0 %v532
    %669 = vmatprep.subr.bf16.mxu0 0
    %670 = vmatpush1.bf16.msra.mxu0 %v533
    %671 = vmatprep.subr.bf16.mxu0 0
    %672 = vmatpush1.bf16.msra.mxu0 %v534
    %673 = vmatprep.subr.bf16.mxu0 0
    %674 = vmatpush1.bf16.msra.mxu0 %v535
    %675 = vmatprep.subr.bf16.mxu0 0
    %676 = vmatpush1.bf16.msra.mxu0 %v536
    %677 = vmatprep.subr.bf16.mxu0 0
    %678 = vmatpush1.bf16.msra.mxu0 %v537
    %679 = vmatprep.subr.bf16.mxu0 0
    %680 = vmatpush1.bf16.msra.mxu0 %v538
    %681 = vmatprep.subr.bf16.mxu0 0
    %682 = vmatpush1.bf16.msra.mxu0 %v539
    %683 = vmatprep.subr.bf16.mxu0 0
    %684 = vmatpush1.bf16.msra.mxu0 %v540
    %685 = vmatprep.mubr.bf16.mxu0 %v254
    %686 = vmatmul.mubr.bf16.gmra.mrb[0].mxu0 %v253
    %v687 = vpop.f32.mrb[0].mxu0
    %v688 = vadd.f32 %v227, %v687
    %v689 = vpop.f32.mrb[0].mxu0
    %v690 = vpop.f32.mrb[0].mxu0
    %v691 = vadd.f32 %v227, %v690
    %v692 = vpop.f32.mrb[0].mxu0
    %693 = vdwg.mxu0
    %694 = vmatprep.subr.bf16.mxu0 0
    %695 = vmatpush1.bf16.msra.mxu0 %v541
    %696 = vmatprep.subr.bf16.mxu0 0
    %697 = vmatpush1.bf16.msra.mxu0 %v542
    %698 = vmatprep.subr.bf16.mxu0 0
    %699 = vmatpush1.bf16.msra.mxu0 %v543
    %700 = vmatprep.subr.bf16.mxu0 0
    %701 = vmatpush1.bf16.msra.mxu0 %v544
    %702 = vmatprep.subr.bf16.mxu0 0
    %703 = vmatpush1.bf16.msra.mxu0 %v545
    %704 = vmatprep.subr.bf16.mxu0 0
    %705 = vmatpush1.bf16.msra.mxu0 %v546
    %706 = vmatprep.subr.bf16.mxu0 0
    %707 = vmatpush1.bf16.msra.mxu0 %v547
    %708 = vmatprep.subr.bf16.mxu0 0
    %709 = vmatpush1.bf16.msra.mxu0 %v548
    %710 = vmatprep.subr.bf16.mxu0 0
    %711 = vmatpush1.bf16.msra.mxu0 %v549
    %712 = vmatprep.subr.bf16.mxu0 0
    %713 = vmatpush1.bf16.msra.mxu0 %v550
    %714 = vmatprep.subr.bf16.mxu0 0
    %715 = vmatpush1.bf16.msra.mxu0 %v551
    %716 = vmatprep.subr.bf16.mxu0 0
    %717 = vmatpush1.bf16.msra.mxu0 %v552
    %718 = vmatprep.subr.bf16.mxu0 0
    %719 = vmatpush1.bf16.msra.mxu0 %v553
    %720 = vmatprep.subr.bf16.mxu0 0
    %721 = vmatpush1.bf16.msra.mxu0 %v554
    %722 = vmatprep.subr.bf16.mxu0 0
    %723 = vmatpush1.bf16.msra.mxu0 %v555
    %724 = vmatprep.subr.bf16.mxu0 0
    %725 = vmatpush1.bf16.msra.mxu0 %v556
    %726 = vmatprep.mubr.bf16.mxu0 %v256
    %727 = vmatmul.mubr.bf16.gmra.mrb[0].mxu0 %v255
    %v728 = vpop.f32.mrb[0].mxu0
    %v729 = vadd.f32 %v688, %v728
    %v730 = vpop.f32.mrb[0].mxu0
    %v731 = vpop.f32.mrb[0].mxu0
    %v732 = vadd.f32 %v691, %v731
    %v733 = vpop.f32.mrb[0].mxu0
    %734 = vdwg.mxu0
    %735 = vmatprep.subr.bf16.mxu0 0
    %736 = vmatpush1.bf16.msra.mxu0 %v557
    %737 = vmatprep.subr.bf16.mxu0 0
    %738 = vmatpush1.bf16.msra.mxu0 %v558
    %739 = vmatprep.subr.bf16.mxu0 0
    %740 = vmatpush1.bf16.msra.mxu0 %v559
    %741 = vmatprep.subr.bf16.mxu0 0
    %742 = vmatpush1.bf16.msra.mxu0 %v560
    %743 = vmatprep.subr.bf16.mxu0 0
    %744 = vmatpush1.bf16.msra.mxu0 %v561
    %745 = vmatprep.subr.bf16.mxu0 0
    %746 = vmatpush1.bf16.msra.mxu0 %v562
    %747 = vmatprep.subr.bf16.mxu0 0
    %748 = vmatpush1.bf16.msra.mxu0 %v563
    %749 = vmatprep.subr.bf16.mxu0 0
    %750 = vmatpush1.bf16.msra.mxu0 %v564
    %751 = vmatprep.subr.bf16.mxu0 0
    %752 = vmatpush1.bf16.msra.mxu0 %v565
    %753 = vmatprep.subr.bf16.mxu0 0
    %754 = vmatpush1.bf16.msra.mxu0 %v566
    %755 = vmatprep.subr.bf16.mxu0 0
    %756 = vmatpush1.bf16.msra.mxu0 %v567
    %757 = vmatprep.subr.bf16.mxu0 0
    %758 = vmatpush1.bf16.msra.mxu0 %v568
    %759 = vmatprep.subr.bf16.mxu0 0
    %760 = vmatpush1.bf16.msra.mxu0 %v569
    %761 = vmatprep.subr.bf16.mxu0 0
    %762 = vmatpush1.bf16.msra.mxu0 %v570
    %763 = vmatprep.subr.bf16.mxu0 0
    %764 = vmatpush1.bf16.msra.mxu0 %v571
    %765 = vmatprep.subr.bf16.mxu0 0
    %766 = vmatpush1.bf16.msra.mxu0 %v572
    %767 = vmatprep.mubr.bf16.mxu0 %v258
    %768 = vmatmul.mubr.bf16.gmra.mrb[0].mxu0 %v257
    %v769 = vpop.f32.mrb[0].mxu0
    %v770 = vadd.f32 %v729, %v769
    %v771 = vpop.f32.mrb[0].mxu0
    %v772 = vpop.f32.mrb[0].mxu0
    %v773 = vadd.f32 %v732, %v772
    %v774 = vpop.f32.mrb[0].mxu0
    %775 = vdwg.mxu0
    %776 = vmatprep.subr.bf16.mxu0 0
    %777 = vmatpush1.bf16.msra.mxu0 %v573
    %778 = vmatprep.subr.bf16.mxu0 0
    %779 = vmatpush1.bf16.msra.mxu0 %v574
    %780 = vmatprep.subr.bf16.mxu0 0
    %781 = vmatpush1.bf16.msra.mxu0 %v575
    %782 = vmatprep.subr.bf16.mxu0 0
    %783 = vmatpush1.bf16.msra.mxu0 %v576
    %784 = vmatprep.subr.bf16.mxu0 0
    %785 = vmatpush1.bf16.msra.mxu0 %v577
    %786 = vmatprep.subr.bf16.mxu0 0
    %787 = vmatpush1.bf16.msra.mxu0 %v578
    %788 = vmatprep.subr.bf16.mxu0 0
    %789 = vmatpush1.bf16.msra.mxu0 %v579
    %790 = vmatprep.subr.bf16.mxu0 0
    %791 = vmatpush1.bf16.msra.mxu0 %v580
    %792 = vmatprep.subr.bf16.mxu0 0
    %793 = vmatpush1.bf16.msra.mxu0 %v581
    %794 = vmatprep.subr.bf16.mxu0 0
    %795 = vmatpush1.bf16.msra.mxu0 %v582
    %796 = vmatprep.subr.bf16.mxu0 0
    %797 = vmatpush1.bf16.msra.mxu0 %v583
    %798 = vmatprep.subr.bf16.mxu0 0
    %799 = vmatpush1.bf16.msra.mxu0 %v584
    %800 = vmatprep.subr.bf16.mxu0 0
    %801 = vmatpush1.bf16.msra.mxu0 %v585
    %802 = vmatprep.subr.bf16.mxu0 0
    %803 = vmatpush1.bf16.msra.mxu0 %v586
    %804 = vmatprep.subr.bf16.mxu0 0
    %805 = vmatpush1.bf16.msra.mxu0 %v587
    %806 = vmatprep.subr.bf16.mxu0 0
    %807 = vmatpush1.bf16.msra.mxu0 %v588
    %808 = vmatprep.mubr.bf16.mxu0 %v260
    %809 = vmatmul.mubr.bf16.gmra.mrb[0].mxu0 %v259
    %v810 = vpop.f32.mrb[0].mxu0
    %v811 = vadd.f32 %v770, %v810
    %v812 = vpop.f32.mrb[0].mxu0
    %v813 = vpop.f32.mrb[0].mxu0
    %v814 = vadd.f32 %v773, %v813
    %v815 = vpop.f32.mrb[0].mxu0
    %816 = vdwg.mxu0
    %v817 = vmax.f32 %v811, 0.0
    %v818 = vmax.f32 %v814, 0.0
    %v819 = vld [vmem:[%s7] sm:$0xf]
    %v820 = vld [vmem:[%s7 + $0x4] sm:$0xf]
    %v821 = vunpack.c.l.bf16 %v819
    %v822 = vunpack.c.l.bf16 %v820
    %v823 = vmul.f32 %v817, %v821
    %v824 = vmul.f32 %v818, %v822
    %v825 = vpack.c.bf16 %v824, %v823
    %v826 = vld [vmem:[#allocation7] sm:$0xf]
    %v827 = vld [vmem:[#allocation7 + $0x4] sm:$0xf]
    %v828 = vld [vmem:[#allocation7 + $0x8] sm:$0xf]
    %v829 = vld [vmem:[#allocation7 + $0xc] sm:$0xf]
    %v830 = vld [vmem:[#allocation7 + $0x10] sm:$0xf]
    %v831 = vld [vmem:[#allocation7 + $0x14] sm:$0xf]
    %v832 = vld [vmem:[#allocation7 + $0x18] sm:$0xf]
    %v833 = vld [vmem:[#allocation7 + $0x1c] sm:$0xf]
    %v834 = vld [vmem:[#allocation7 + $0x20] sm:$0xf]
    %v835 = vld [vmem:[#allocation7 + $0x24] sm:$0xf]
    %v836 = vld [vmem:[#allocation7 + $0x28] sm:$0xf]
    %v837 = vld [vmem:[#allocation7 + $0x2c] sm:$0xf]
    %v838 = vld [vmem:[#allocation7 + $0x30] sm:$0xf]
    %v839 = vld [vmem:[#allocation7 + $0x34] sm:$0xf]
    %v840 = vld [vmem:[#allocation7 + $0x38] sm:$0xf]
    %v841 = vld [vmem:[#allocation7 + $0x3c] sm:$0xf]
    %v842 = vld [vmem:[%s4] sm:$0x1]
    %v844 = vlaneseq
    %v845 = vshrl.u32 %v844, 7
    %v846 = vsub.s32 0, %v845
    %v847 = vrot.slane %v842, %v846
    %v865 = vunpack.c.l.b16 %v826
    %v866 = vunpack.c.l.b16 %v827
    %v867 = vunpack.c.l.b16 %v828
    %v868 = vunpack.c.l.b16 %v829
    %v869 = vunpack.c.l.b16 %v830
    %v870 = vunpack.c.l.b16 %v831
    %v871 = vunpack.c.l.b16 %v832
    %v872 = vunpack.c.l.b16 %v833
    %v873 = vunpack.c.l.b16 %v834
    %v874 = vunpack.c.l.b16 %v835
    %v875 = vunpack.c.l.b16 %v836
    %v876 = vunpack.c.l.b16 %v837
    %v877 = vunpack.c.l.b16 %v838
    %v878 = vunpack.c.l.b16 %v839
    %v879 = vunpack.c.l.b16 %v840
    %v880 = vunpack.c.l.b16 %v841
    %v881 = vpack.c.b16 %v866, %v865
    %v882 = vpack.c.b16 %v868, %v867
    %v883 = vpack.c.b16 %v870, %v869
    %v884 = vpack.c.b16 %v872, %v871
    %v885 = vpack.c.b16 %v874, %v873
    %v886 = vpack.c.b16 %v876, %v875
    %v887 = vpack.c.b16 %v878, %v877
    %v888 = vpack.c.b16 %v880, %v879
    %897 = vmatprep.subr.bf16.mxu0 0
    %898 = vmatpush1.bf16.msra.mxu0 %v881
    %899 = vmatprep.subr.bf16.mxu0 0
    %900 = vmatpush1.bf16.msra.mxu0 %v882
    %901 = vmatprep.subr.bf16.mxu0 0
    %902 = vmatpush1.bf16.msra.mxu0 %v883
    %903 = vmatprep.subr.bf16.mxu0 0
    %904 = vmatpush1.bf16.msra.mxu0 %v884
    %905 = vmatprep.subr.bf16.mxu0 0
    %906 = vmatpush1.bf16.msra.mxu0 %v885
    %907 = vmatprep.subr.bf16.mxu0 0
    %908 = vmatpush1.bf16.msra.mxu0 %v886
    %909 = vmatprep.subr.bf16.mxu0 0
    %910 = vmatpush1.bf16.msra.mxu0 %v887
    %911 = vmatprep.subr.bf16.mxu0 0
    %912 = vmatpush1.bf16.msra.mxu0 %v888
    %913 = vmatprep.subr.bf16.mxu0 0
    %914 = vmatpush1.bf16.msra.mxu0 0
    %915 = vmatprep.subr.bf16.mxu0 0
    %916 = vmatpush1.bf16.msra.mxu0 0
    %917 = vmatprep.subr.bf16.mxu0 0
    %918 = vmatpush1.bf16.msra.mxu0 0
    %919 = vmatprep.subr.bf16.mxu0 0
    %920 = vmatpush1.bf16.msra.mxu0 0
    %921 = vmatprep.subr.bf16.mxu0 0
    %922 = vmatpush1.bf16.msra.mxu0 0
    %923 = vmatprep.subr.bf16.mxu0 0
    %924 = vmatpush1.bf16.msra.mxu0 0
    %925 = vmatprep.subr.bf16.mxu0 0
    %926 = vmatpush1.bf16.msra.mxu0 0
    %927 = vmatprep.subr.bf16.mxu0 0
    %928 = vmatpush1.bf16.msra.mxu0 0
    %929 = vmatprep.mubr.bf16.mxu0 0
    %930 = vmatmul.mubr.bf16.gmra.mrb[0].mxu0 %v825
    %v931 = vpop.f32.mrb[0].mxu0
    %v932 = vadd.f32 %v847, %v931
    %v933 = vpop.f32.mrb[0].mxu0
    %v934 = vpop.f32.mrb[0].mxu0
    %v935 = vadd.f32 %v847, %v934
    %v936 = vpop.f32.mrb[0].mxu0
    %937 = vdwg.mxu0
    %v938 = vmax.f32 %v932, 0.0
    %v939 = vmax.f32 %v935, 0.0
    %s940 = scalar_lea.vmem %s7, 8
    %v941 = vld [vmem:[%s940] sm:$0xf]
    %v942 = vld [vmem:[%s940 + $0x4] sm:$0xf]
    %v943 = vunpack.c.l.bf16 %v941
    %v944 = vunpack.c.l.bf16 %v942
    %v945 = vmul.f32 %v938, %v943
    %v946 = vmul.f32 %v939, %v944
    %v947 = vpack.c.bf16 %v946, %v945
    %v948 = vld [vmem:[#allocation8] sm:$0xf]
    %v949 = vld [vmem:[#allocation8 + $0x4] sm:$0xf]
    %v950 = vld [vmem:[#allocation8 + $0x8] sm:$0xf]
    %v951 = vld [vmem:[#allocation8 + $0xc] sm:$0xf]
    %v952 = vld [vmem:[#allocation8 + $0x10] sm:$0xf]
    %v953 = vld [vmem:[#allocation8 + $0x14] sm:$0xf]
    %v954 = vld [vmem:[#allocation8 + $0x18] sm:$0xf]
    %v955 = vld [vmem:[#allocation8 + $0x1c] sm:$0xf]
    %v956 = vld [vmem:[#allocation8 + $0x20] sm:$0xf]
    %v957 = vld [vmem:[#allocation8 + $0x24] sm:$0xf]
    %v958 = vld [vmem:[#allocation8 + $0x28] sm:$0xf]
    %v959 = vld [vmem:[#allocation8 + $0x2c] sm:$0xf]
    %v960 = vld [vmem:[#allocation8 + $0x30] sm:$0xf]
    %v961 = vld [vmem:[#allocation8 + $0x34] sm:$0xf]
    %v962 = vld [vmem:[#allocation8 + $0x38] sm:$0xf]
    %v963 = vld [vmem:[#allocation8 + $0x3c] sm:$0xf]
    %v964 = vld [vmem:[%s6] sm:$0x1]
    %v966 = vlaneseq
    %v967 = vshrl.u32 %v966, 7
    %v968 = vsub.s32 0, %v967
    %v969 = vrot.slane %v964, %v968
    %v987 = vunpack.c.l.b16 %v948
    %v988 = vunpack.c.l.b16 %v949
    %v989 = vunpack.c.l.b16 %v950
    %v990 = vunpack.c.l.b16 %v951
    %v991 = vunpack.c.l.b16 %v952
    %v992 = vunpack.c.l.b16 %v953
    %v993 = vunpack.c.l.b16 %v954
    %v994 = vunpack.c.l.b16 %v955
    %v995 = vunpack.c.l.b16 %v956
    %v996 = vunpack.c.l.b16 %v957
    %v997 = vunpack.c.l.b16 %v958
    %v998 = vunpack.c.l.b16 %v959
    %v999 = vunpack.c.l.b16 %v960
    %v1000 = vunpack.c.l.b16 %v961
    %v1001 = vunpack.c.l.b16 %v962
    %v1002 = vunpack.c.l.b16 %v963
    %v1003 = vpack.c.b16 %v988, %v987
    %v1004 = vpack.c.b16 %v990, %v989
    %v1005 = vpack.c.b16 %v992, %v991
    %v1006 = vpack.c.b16 %v994, %v993
    %v1007 = vpack.c.b16 %v996, %v995
    %v1008 = vpack.c.b16 %v998, %v997
    %v1009 = vpack.c.b16 %v1000, %v999
    %v1010 = vpack.c.b16 %v1002, %v1001
    %1019 = vmatprep.subr.bf16.mxu0 0
    %1020 = vmatpush1.bf16.msra.mxu0 %v1003
    %1021 = vmatprep.subr.bf16.mxu0 0
    %1022 = vmatpush1.bf16.msra.mxu0 %v1004
    %1023 = vmatprep.subr.bf16.mxu0 0
    %1024 = vmatpush1.bf16.msra.mxu0 %v1005
    %1025 = vmatprep.subr.bf16.mxu0 0
    %1026 = vmatpush1.bf16.msra.mxu0 %v1006
    %1027 = vmatprep.subr.bf16.mxu0 0
    %1028 = vmatpush1.bf16.msra.mxu0 %v1007
    %1029 = vmatprep.subr.bf16.mxu0 0
    %1030 = vmatpush1.bf16.msra.mxu0 %v1008
    %1031 = vmatprep.subr.bf16.mxu0 0
    %1032 = vmatpush1.bf16.msra.mxu0 %v1009
    %1033 = vmatprep.subr.bf16.mxu0 0
    %1034 = vmatpush1.bf16.msra.mxu0 %v1010
    %1035 = vmatprep.subr.bf16.mxu0 0
    %1036 = vmatpush1.bf16.msra.mxu0 0
    %1037 = vmatprep.subr.bf16.mxu0 0
    %1038 = vmatpush1.bf16.msra.mxu0 0
    %1039 = vmatprep.subr.bf16.mxu0 0
    %1040 = vmatpush1.bf16.msra.mxu0 0
    %1041 = vmatprep.subr.bf16.mxu0 0
    %1042 = vmatpush1.bf16.msra.mxu0 0
    %1043 = vmatprep.subr.bf16.mxu0 0
    %1044 = vmatpush1.bf16.msra.mxu0 0
    %1045 = vmatprep.subr.bf16.mxu0 0
    %1046 = vmatpush1.bf16.msra.mxu0 0
    %1047 = vmatprep.subr.bf16.mxu0 0
    %1048 = vmatpush1.bf16.msra.mxu0 0
    %1049 = vmatprep.subr.bf16.mxu0 0
    %1050 = vmatpush1.bf16.msra.mxu0 0
    %1051 = vmatprep.mubr.bf16.mxu0 0
    %1052 = vmatmul.mubr.bf16.gmra.mrb[0].mxu0 %v947
    %v1053 = vpop.f32.mrb[0].mxu0
    %v1054 = vadd.f32 %v969, %v1053
    %v1055 = vpop.f32.mrb[0].mxu0
    %v1056 = vpop.f32.mrb[0].mxu0
    %v1057 = vadd.f32 %v969, %v1056
    %v1058 = vpop.f32.mrb[0].mxu0
    %1059 = vdwg.mxu0
    %1060 = vst [vmem:[#allocation10] sm:$0xff] %v1054
    %1061 = vst [vmem:[#allocation10 + $0x8] sm:$0xff] %v1057
    // Predicated region
    $region50: #{tpu_custom_call.1} parent=1 // pred_check
      _
    $region51: #{tpu_custom_call.1} parent=1 // pred_check_branch
      %1063 = sbr.rel (0) target = $region53
    $region52: #{tpu_custom_call.1} parent=1 // pred_region
      %s1065 = ssub.s32 256, 256
      %1066 = vsyncadd [#allocation4], %s1065
      %s1067 = sshll.u32 [#allocation10], 4
      %s1068 = int_to_ptr.vmem [resolvable:$true] %s1067
      %1073 = dma.vmem_to_hbm [thread:$0]  %s1068, 256, %s8, [#allocation4], 128, 128, 8
    $region53: #{tpu_custom_call.1} parent=1 // pred_fallthru
      _
    // Predicated region
    $region54: #{tpu_custom_call.1} parent=1 // pred_check
      _
    $region55: #{tpu_custom_call.1} parent=1 // pred_check_branch
      %1075 = sbr.rel (0) target = $region57
    $region56: #{tpu_custom_call.1} parent=1 // pred_region
      %1076 = dma.done [#allocation4], 256
    $region57: #{tpu_custom_call.1} parent=1 // pred_fallthru
      _
    %1077 = vsyncpa [#allocation3], 1
    %1078 = vsyncpa [#allocation6], 1
    %1079 = vsyncpa [#allocation9], 1
    %1080 = vsyncpa [#allocation4], 1

</llo_original>
